<compile_context>
chip_gen: v7x
topology: tpu7x:2x2x1
jax: 0.10.0
libtpu: 0.0.40
codegen_flags: <defaults>
</compile_context>

<pallas_src>
import functools

import jax
import jax.numpy as jnp
from jax import lax
from jax.experimental import pallas as pl
from jax.experimental.pallas import tpu as pltpu


def _round_up(x, m):
    return (x + m - 1) // m * m


def _vmem_per_element_bytes(S, F, itemsize=4):
    """Rough padded-VMEM footprint of one batch element's working set."""
    s_lane = _round_up(max(S, 1), 128)
    f_sub = _round_up(max(F, 1), 8)
    s_sub = _round_up(max(S, 1), 8)
    tile = f_sub * s_lane * itemsize        # one (F, S) f32 tile in VMEM
    logits = s_sub * s_lane * itemsize      # (S, S) f32 softmax temporaries
    # 3 inputs + 1 output, double-buffered by the pipeline, + softmax temps.
    return 2 * 4 * tile + 4 * logits


def _choose_batch_tile(B, S, F, budget_bytes=40 << 20):
    """Batch elements per grid step: large enough to amortize per-step
    overhead and give the DMA bigger transfers, small enough for the VMEM
    budget (v7x only has 64 MiB physical), and leaving >= 2 grid steps when
    possible so v7x's two TensorCores both get work."""
    per_elem = _vmem_per_element_bytes(S, F)
    bt = int(max(1, min(B, 8, budget_bytes // per_elem)))
    while bt > 1 and pl.cdiv(B, bt) < 2:
        bt -= 1
    while B % bt:
        bt -= 1
    return bt


def _sa_sagittal_kernel(x_ref, xt_ref, g_ref, o_ref, *, bt, precise):
    mm_dtype = jnp.float32 if precise else jnp.bfloat16

    for b in range(bt):  # static unroll over the batch elements of this block
        x = x_ref[b]     # (F, S)  columns = query positions s
        xt = xt_ref[b]   # (F, S)  columns = key positions t
        g = g_ref[b]     # (F, S)  columns = key positions t

        # logits[s, t] = sum_f x[f, s] * xt[f, t]  ->  (S, S)
        # One small in-VMEM (XLU) transpose of the x tile replaces the four
        # full-tensor HBM permutes the previous version did in the wrapper.
        x_sf = x.T.astype(mm_dtype)                       # (S, F)
        logits = jnp.dot(x_sf, xt.astype(mm_dtype),
                         preferred_element_type=jnp.float32)

        # Numerically stable softmax over t, in f32.
        logits = logits - jnp.max(logits, axis=-1, keepdims=True)
        p = jnp.exp(logits)
        denom = jnp.sum(p, axis=-1, keepdims=True)
        if precise:
            p = p / denom                                 # exact torch-f32 semantics
        else:
            # EUP approximate reciprocal: frees VALU slots on the fast path.
            p = p * pl.reciprocal(denom, approx=True)

        # out[f, s] = sum_t g[f, t] * p[s, t]  ->  (F, S)
        # Contraction over the last dim of both operands (A @ B^T), expressed
        # via dot_general so no transpose is materialized.
        out = lax.dot_general(
            g.astype(mm_dtype), p.astype(mm_dtype),
            dimension_numbers=(((1,), (1,)), ((), ())),
            preferred_element_type=jnp.float32)

        o_ref[b] = out.astype(o_ref.dtype)


def sa_sagittal_block(x_, x_t, g_x, *, precise=True, batch_tile=None):
    """JAX/Pallas equivalent of saSagittalBlock.forward.

    Inputs: (B, C, H, W, S).  Output: (B, C, H, W, S).
    precise=True  : f32 MXU matmuls + exact normalization (torch f32 semantics).
    precise=False : bf16 MXU operands with f32 accumulation + EUP approx
                    reciprocal (higher MXU throughput, ~1e-2 relative error).
    """
    B, C, H, W, S = x_.shape
    F = C * H * W

    # (B, C, H, W, S) -> (B, F, S) is a pure view: no HBM relayout is emitted.
    xf = x_.reshape(B, F, S)
    xtf = x_t.reshape(B, F, S)
    gf = g_x.reshape(B, F, S)

    bt = _choose_batch_tile(B, S, F) if batch_tile is None else batch_tile
    if B % bt:
        raise ValueError(f"batch_tile={bt} must divide B={B}")
    grid = (B // bt,)

    # TODO(synk): add a flash-style F-tiled path (accumulate the (S, S) logits
    # over F chunks) for shapes where a single (bt, F, S) block would exceed
    # v7x's 64 MiB VMEM; current/demo shapes fit comfortably.
    vmem_limit = int(min(max(bt * _vmem_per_element_bytes(S, F) + (4 << 20),
                             32 << 20), 100 << 20))

    spec = pl.BlockSpec((bt, F, S), lambda i: (i, 0, 0))
    out_bfs = pl.pallas_call(
        functools.partial(_sa_sagittal_kernel, bt=bt, precise=precise),
        out_shape=jax.ShapeDtypeStruct((B, F, S), x_.dtype),
        grid=grid,
        in_specs=[spec, spec, spec],
        out_specs=spec,
        compiler_params=pltpu.CompilerParams(
            dimension_semantics=("parallel",),
            vmem_limit_bytes=vmem_limit,
        ),
    )(xf, xtf, gf)

    # (B, F, S) -> (B, C, H, W, S) is again a pure view.
    return out_bfs.reshape(B, C, H, W, S)


def _reference(x_, x_t, g_x):
    # Pure-JAX mirror of the torch code (f32 throughout).
    B = x_.shape[0]
    S = x_.shape[4]
    ori = jnp.transpose(g_x, (0, 4, 2, 3, 1))
    ori_size = ori.shape
    xf = jnp.transpose(x_, (0, 4, 2, 3, 1)).reshape(B, S, -1)
    gf = ori.reshape(B, S, -1)
    xtf = jnp.transpose(x_t, (0, 4, 2, 3, 1)).reshape(B, S, -1)
    xtf = jnp.transpose(xtf, (0, 2, 1))
    attn = jnp.matmul(xf, xtf)
    attn = jax.nn.softmax(attn, axis=-1)
    out = jnp.matmul(attn, gf)
    out = out.reshape(B, S, *ori_size[2:])
    out = jnp.transpose(out, (0, 4, 2, 3, 1))
    return out


def _reference_bf16(x_, x_t, g_x):
    # Mirror of the fast (bf16-operand) kernel path, for tolerance checking.
    B, C, H, W, S = x_.shape
    to_bsf = lambda a: jnp.transpose(a, (0, 4, 2, 3, 1)).reshape(B, S, -1)
    xf = to_bsf(x_).astype(jnp.bfloat16)
    xtf = to_bsf(x_t).astype(jnp.bfloat16)
    gf = to_bsf(g_x).astype(jnp.bfloat16)
    attn = jnp.einsum("bsf,btf->bst", xf, xtf,
                      preferred_element_type=jnp.float32)
    attn = jax.nn.softmax(attn, axis=-1).astype(jnp.bfloat16)
    out = jnp.einsum("bst,btf->bsf", attn, gf,
                     preferred_element_type=jnp.float32)
    out = out.reshape(B, S, H, W, C)
    return jnp.transpose(out, (0, 4, 2, 3, 1)).astype(x_.dtype)


if __name__ == "__main__":
    # saSagittalBlock has no learned parameters; only inputs are needed.
    key = jax.random.PRNGKey(0)
    k1, k2, k3 = jax.random.split(key, 3)
    B, C, H, W, S = 2, 4, 8, 8, 8   # F = C*H*W = 256
    x_ = jax.random.normal(k1, (B, C, H, W, S), dtype=jnp.float32)
    x_t = jax.random.normal(k2, (B, C, H, W, S), dtype=jnp.float32)
    g_x = jax.random.normal(k3, (B, C, H, W, S), dtype=jnp.float32)

    # Precise path: must match the torch-style f32 reference.
    out = jax.block_until_ready(sa_sagittal_block(x_, x_t, g_x, precise=True))
    ref = jax.block_until_ready(_reference(x_, x_t, g_x))
    assert out.shape == (B, C, H, W, S)
    assert jnp.allclose(out, ref, atol=1e-3, rtol=1e-3), "precise path mismatch"

    # Fast path: bf16 MXU operands + approx reciprocal, checked against a
    # matching bf16 pure-JAX reference.
    out_fast = jax.block_until_ready(sa_sagittal_block(x_, x_t, g_x, precise=False))
    ref_bf16 = jax.block_until_ready(_reference_bf16(x_, x_t, g_x))
    assert jnp.allclose(out_fast, ref_bf16, atol=2e-2, rtol=2e-2), "fast path mismatch"

    print("KERNEL_OK")
</pallas_src>

<mosaic_0001>
module attributes {stable_mosaic.version = 11 : i64} {
  func.func @_sa_sagittal_kernel(%arg0: i32, %arg1: memref<1x256x8xf32, #tpu.memory_space<vmem>>, %arg2: memref<1x256x8xf32, #tpu.memory_space<vmem>>, %arg3: memref<1x256x8xf32, #tpu.memory_space<vmem>>, %arg4: memref<1x256x8xf32, #tpu.memory_space<vmem>>) attributes {dimension_semantics = [#tpu.dimension_semantics<parallel>], iteration_bounds = array<i64: 2>, scalar_prefetch = 0 : i64, scratch_operands = 0 : i64, tpu.core_type = #tpu.core_type<tc>, window_params = [{transform_indices = @transform_0, window_bounds = array<i64: 1, 256, 8>}, {transform_indices = @transform_1, window_bounds = array<i64: 1, 256, 8>}, {transform_indices = @transform_2, window_bounds = array<i64: 1, 256, 8>}, {transform_indices = @transform_3, window_bounds = array<i64: 1, 256, 8>}]} {
    %c0 = arith.constant 0 : index
    %c0_0 = arith.constant 0 : index
    %c0_1 = arith.constant 0 : index
    %0 = vector.load %arg1[%c0, %c0_0, %c0_1] : memref<1x256x8xf32, #tpu.memory_space<vmem>>, vector<1x256x8xf32>
    %1 = vector.shape_cast %0 : vector<1x256x8xf32> to vector<256x8xf32>
    %c0_2 = arith.constant 0 : index
    %c0_3 = arith.constant 0 : index
    %c0_4 = arith.constant 0 : index
    %2 = vector.load %arg2[%c0_2, %c0_3, %c0_4] : memref<1x256x8xf32, #tpu.memory_space<vmem>>, vector<1x256x8xf32>
    %3 = vector.shape_cast %2 : vector<1x256x8xf32> to vector<256x8xf32>
    %c0_5 = arith.constant 0 : index
    %c0_6 = arith.constant 0 : index
    %c0_7 = arith.constant 0 : index
    %4 = vector.load %arg3[%c0_5, %c0_6, %c0_7] : memref<1x256x8xf32, #tpu.memory_space<vmem>>, vector<1x256x8xf32>
    %5 = vector.shape_cast %4 : vector<1x256x8xf32> to vector<256x8xf32>
    %6 = tpu.transpose %1, [1, 0] : vector<256x8xf32> -> vector<8x256xf32>
    %cst = arith.constant dense<0.000000e+00> : vector<8x8xf32>
    %7 = tpu.matmul %6, %3, %cst {dimension_numbers = #tpu.dot_dimension_numbers<[1], [0], [0], [1], [0, 0, 1, 1], [], []>} : vector<8x256xf32>, vector<256x8xf32>, vector<8x8xf32> -> vector<8x8xf32>
    %cst_8 = arith.constant dense<0xFF800000> : vector<8xf32>
    %8 = vector.multi_reduction <maximumf>, %7, %cst_8 [1] : vector<8x8xf32> to vector<8xf32>
    %9 = vector.shape_cast %8 : vector<8xf32> to vector<8x1xf32>
    %10 = vector.broadcast %9 : vector<8x1xf32> to vector<8x8xf32>
    %11 = arith.subf %7, %10 : vector<8x8xf32>
    %12 = math.exp %11 : vector<8x8xf32>
    %cst_9 = arith.constant dense<0.000000e+00> : vector<8xf32>
    %13 = vector.multi_reduction <add>, %12, %cst_9 [1] : vector<8x8xf32> to vector<8xf32>
    %14 = vector.shape_cast %13 : vector<8xf32> to vector<8x1xf32>
    %15 = vector.broadcast %14 : vector<8x1xf32> to vector<8x8xf32>
    %16 = arith.divf %12, %15 : vector<8x8xf32>
    %cst_10 = arith.constant dense<0.000000e+00> : vector<256x8xf32>
    %17 = tpu.matmul %5, %16, %cst_10 {dimension_numbers = #tpu.dot_dimension_numbers<[1], [1], [0], [0], [0, 0, 1, 0], [], []>} : vector<256x8xf32>, vector<8x8xf32>, vector<256x8xf32> -> vector<256x8xf32>
    %c0_11 = arith.constant 0 : index
    %c0_12 = arith.constant 0 : index
    %c0_13 = arith.constant 0 : index
    %18 = vector.load %arg4[%c0_11, %c0_12, %c0_13] : memref<1x256x8xf32, #tpu.memory_space<vmem>>, vector<1x256x8xf32>
    %19 = vector.shape_cast %18 : vector<1x256x8xf32> to vector<256x8xf32>
    %20 = vector.shape_cast %17 : vector<256x8xf32> to vector<1x256x8xf32>
    tpu.vector_store %arg4[%c0_11, %c0_12, %c0_13], %20 {strides = array<i32>} : memref<1x256x8xf32, #tpu.memory_space<vmem>>, vector<1x256x8xf32>,
    return
  }
  func.func @transform_0(%arg0: i32) -> (i32, i32, i32) {
    %c0_i32 = arith.constant 0 : i32
    %c0_i32_0 = arith.constant 0 : i32
    %c0_i32_1 = arith.constant 0 : i32
    return %arg0, %c0_i32, %c0_i32_0 : i32, i32, i32
  }
  func.func @transform_1(%arg0: i32) -> (i32, i32, i32) {
    %c0_i32 = arith.constant 0 : i32
    %c0_i32_0 = arith.constant 0 : i32
    %c0_i32_1 = arith.constant 0 : i32
    return %arg0, %c0_i32, %c0_i32_0 : i32, i32, i32
  }
  func.func @transform_2(%arg0: i32) -> (i32, i32, i32) {
    %c0_i32 = arith.constant 0 : i32
    %c0_i32_0 = arith.constant 0 : i32
    %c0_i32_1 = arith.constant 0 : i32
    return %arg0, %c0_i32, %c0_i32_0 : i32, i32, i32
  }
  func.func @transform_3(%arg0: i32) -> (i32, i32, i32) {
    %c0_i32 = arith.constant 0 : i32
    %c0_i32_0 = arith.constant 0 : i32
    %c0_i32_1 = arith.constant 0 : i32
    return %arg0, %c0_i32, %c0_i32_0 : i32, i32, i32
  }
}

</mosaic_0001>

<llo_original>
// kernel: tpu_custom_call.1
$region0: #{tpu_custom_call.1}
  #allocation0 [shape = 'u32[]', space=smem, size = 0x4, offset = 0x4, fixed_abs, tag = 'smem constant byte address 0x4 - core index']
  #allocation1 [shape = 'u32[144,128]{1,0:T(1,128)}', space=vmem, size = 0x12000, scoped, tag = 'internal scratch']
  %s0 = inlined_call_operand.vmem [shape: f32[2,256,8], index: 0, kind: input, shape index: {}]
  %s1 = inlined_call_operand.vmem [shape: f32[2,256,8], index: 1, kind: input, shape index: {}]
  %s2 = inlined_call_operand.vmem [shape: f32[2,256,8], index: 2, kind: input, shape index: {}]
  %s3 = inlined_call_operand.vmem [shape: f32[2,256,8], index: 3, kind: output, shape index: {}]
  %s4 = sld [smem:[#allocation0]]
  $region45: #{tpu_custom_call.1} parent=0
    _
  %s6 = ssub.s32 1, %s4
  %s7 = scalar_select 0, %s6, %s4
  loop: start=0, step=1, limit=4
  $region2: #{tpu_custom_call.1} parent=0 // loop_pre_header
    _
  $region3: #{tpu_custom_call.1} parent=0 // loop_header
    %s9 = sphi 0, %s13
    %p10 = scmp.ge.s32.totalorder %s9, 4
    %s19 = sphi 0, %s21
    %s22 = sphi 0, %s19
    %s23 = sphi 0, %s22
    %s39 = sphi 0, %s23
    %s45 = sphi 0, %s47
    %s48 = sphi 0, %s45
    %s49 = sphi 0, %s48
    %s65 = sphi 0, %s49
    %s71 = sphi 0, %s73
    %s74 = sphi 0, %s71
    %s75 = sphi 0, %s74
    %s91 = sphi 0, %s75
    %s97 = sphi 0, %s99
    %s100 = sphi 0, %s97
    %s101 = sphi 0, %s100
    %s117 = sphi 0, %s101
  $region4: #{tpu_custom_call.1} parent=0 // loop_header_branch
    %12 = sbr.rel (%p10) target = $region8
  $region5: #{tpu_custom_call.1} parent=0 // loop_body
    %s14 = ssub.s32 %s9, 1
    %s15 = ssub.s32 %s9, 2
    %s16 = sadd.s32 %s9, 1
    %s17 = ssub.s32 %s9, %s16
    %p18 = scmp.eq.s32.totalorder %s17, 0
    %s20 = sadd.s32 %s19, 1
    %s21 = scalar_select %p18, %s19, %s20
    %p24 = pneg %p18
    %p25 = scmp.eq.s32.totalorder %s9, 1
    %p26 = por %p24, %p25
    %p27 = scmp.ne.s32.totalorder %s19, %s22
    %p28 = scmp.eq.s32.totalorder %s9, 0
    %p29 = por %p27, %p28
    %p30 = scmp.ne.s32.totalorder %s19, %s22
    %p31 = scmp.eq.s32.totalorder %s14, 1
    %p32 = por %p30, %p31
    %p33 = scmp.ne.s32.totalorder %s22, %s23
    %p34 = scmp.eq.s32.totalorder %s14, 0
    %p35 = por %p33, %p34
    %p36 = scmp.ne.s32.totalorder %s22, %s23
    %p37 = scmp.eq.s32.totalorder %s15, 1
    %p38 = por %p36, %p37
    %p40 = scmp.ne.s32.totalorder %s23, %s39
    %p41 = scmp.eq.s32.totalorder %s15, 0
    %p42 = por %p40, %p41
    %s43 = ssub.s32 %s9, %s16
    %p44 = scmp.eq.s32.totalorder %s43, 0
    %s46 = sadd.s32 %s45, 1
    %s47 = scalar_select %p44, %s45, %s46
    %p50 = pneg %p44
    %p51 = scmp.eq.s32.totalorder %s9, 1
    %p52 = por %p50, %p51
    %p53 = scmp.ne.s32.totalorder %s45, %s48
    %p54 = scmp.eq.s32.totalorder %s9, 0
    %p55 = por %p53, %p54
    %p56 = scmp.ne.s32.totalorder %s45, %s48
    %p57 = scmp.eq.s32.totalorder %s14, 1
    %p58 = por %p56, %p57
    %p59 = scmp.ne.s32.totalorder %s48, %s49
    %p60 = scmp.eq.s32.totalorder %s14, 0
    %p61 = por %p59, %p60
    %p62 = scmp.ne.s32.totalorder %s48, %s49
    %p63 = scmp.eq.s32.totalorder %s15, 1
    %p64 = por %p62, %p63
    %p66 = scmp.ne.s32.totalorder %s49, %s65
    %p67 = scmp.eq.s32.totalorder %s15, 0
    %p68 = por %p66, %p67
    %s69 = ssub.s32 %s9, %s16
    %p70 = scmp.eq.s32.totalorder %s69, 0
    %s72 = sadd.s32 %s71, 1
    %s73 = scalar_select %p70, %s71, %s72
    %p76 = pneg %p70
    %p77 = scmp.eq.s32.totalorder %s9, 1
    %p78 = por %p76, %p77
    %p79 = scmp.ne.s32.totalorder %s71, %s74
    %p80 = scmp.eq.s32.totalorder %s9, 0
    %p81 = por %p79, %p80
    %p82 = scmp.ne.s32.totalorder %s71, %s74
    %p83 = scmp.eq.s32.totalorder %s14, 1
    %p84 = por %p82, %p83
    %p85 = scmp.ne.s32.totalorder %s74, %s75
    %p86 = scmp.eq.s32.totalorder %s14, 0
    %p87 = por %p85, %p86
    %p88 = scmp.ne.s32.totalorder %s74, %s75
    %p89 = scmp.eq.s32.totalorder %s15, 1
    %p90 = por %p88, %p89
    %p92 = scmp.ne.s32.totalorder %s75, %s91
    %p93 = scmp.eq.s32.totalorder %s15, 0
    %p94 = por %p92, %p93
    %s95 = ssub.s32 %s9, %s16
    %p96 = scmp.eq.s32.totalorder %s95, 0
    %s98 = sadd.s32 %s97, 1
    %s99 = scalar_select %p96, %s97, %s98
    %p102 = pneg %p96
    %p103 = scmp.eq.s32.totalorder %s9, 1
    %p104 = por %p102, %p103
    %p105 = scmp.ne.s32.totalorder %s97, %s100
    %p106 = scmp.eq.s32.totalorder %s9, 0
    %p107 = por %p105, %p106
    %p108 = scmp.ne.s32.totalorder %s97, %s100
    %p109 = scmp.eq.s32.totalorder %s14, 1
    %p110 = por %p108, %p109
    %p111 = scmp.ne.s32.totalorder %s100, %s101
    %p112 = scmp.eq.s32.totalorder %s14, 0
    %p113 = por %p111, %p112
    %p114 = scmp.ne.s32.totalorder %s100, %s101
    %p115 = scmp.eq.s32.totalorder %s15, 1
    %p116 = por %p114, %p115
    %p118 = scmp.ne.s32.totalorder %s101, %s117
    %p119 = scmp.eq.s32.totalorder %s15, 0
    %p120 = por %p118, %p119
    %p121 = scmp.le.s32.totalorder 1, %s9
    %p122 = scmp.lt.s32.totalorder %s9, 3
    %p123 = pnand %p121, %p122
    %p124 = pneg %p123
    // Predicated region
    $region9: #{tpu_custom_call.1} parent=5 // pred_check
      _
    $region10: #{tpu_custom_call.1} parent=5 // pred_check_branch
      %126 = sbr.rel (%p123) target = $region12
    $region11: #{tpu_custom_call.1} parent=5 // pred_region
      %s127 = ssub.s32 %s9, 1
    $region12: #{tpu_custom_call.1} parent=5 // pred_fallthru
      _
    %p128 = scmp.lt.s32.totalorder %s9, 2
    // Predicated region
    $region13: #{tpu_custom_call.1} parent=5 // pred_check
      %p129 = pneg %p128
    $region14: #{tpu_custom_call.1} parent=5 // pred_check_branch
      %131 = sbr.rel (%p129) target = $region16
    $region15: #{tpu_custom_call.1} parent=5 // pred_region
      // Predicated region
      $region17: #{tpu_custom_call.1} parent=15 // pred_check
        %p132 = pneg %p29
      $region18: #{tpu_custom_call.1} parent=15 // pred_check_branch
        %134 = sbr.rel (%p132) target = $region20
      $region19: #{tpu_custom_call.1} parent=15 // pred_region
        %p135 = scmp.lt.s32.totalorder %s9, 1
        %s136 = scalar_select %p135, %s9, 1
        %s137 = smul.addr %s136, 32
        %s138 = smul.addr %s137, 8
        %s139 = scalar_lea.vmem %s0, %s138
      $region20: #{tpu_custom_call.1} parent=15 // pred_fallthru
        _
      // Predicated region
      $region21: #{tpu_custom_call.1} parent=15 // pred_check
        %p140 = pneg %p55
      $region22: #{tpu_custom_call.1} parent=15 // pred_check_branch
        %142 = sbr.rel (%p140) target = $region24
      $region23: #{tpu_custom_call.1} parent=15 // pred_region
        %p143 = scmp.lt.s32.totalorder %s9, 1
        %s144 = scalar_select %p143, %s9, 1
        %s145 = smul.addr %s144, 32
        %s146 = smul.addr %s145, 8
        %s147 = scalar_lea.vmem %s1, %s146
      $region24: #{tpu_custom_call.1} parent=15 // pred_fallthru
        _
      // Predicated region
      $region25: #{tpu_custom_call.1} parent=15 // pred_check
        %p148 = pneg %p81
      $region26: #{tpu_custom_call.1} parent=15 // pred_check_branch
        %150 = sbr.rel (%p148) target = $region28
      $region27: #{tpu_custom_call.1} parent=15 // pred_region
        %p151 = scmp.lt.s32.totalorder %s9, 1
        %s152 = scalar_select %p151, %s9, 1
        %s153 = smul.addr %s152, 32
        %s154 = smul.addr %s153, 8
        %s155 = scalar_lea.vmem %s2, %s154
      $region28: #{tpu_custom_call.1} parent=15 // pred_fallthru
        _
    $region16: #{tpu_custom_call.1} parent=5 // pred_fallthru
      _
    %p156 = scmp.le.s32.totalorder 1, %s9
    %p157 = scmp.lt.s32.totalorder %s9, 3
    %p158 = pnand %p156, %p157
    %p159 = pneg %p158
    // Predicated region
    $region29: #{tpu_custom_call.1} parent=5 // pred_check
      _
    $region30: #{tpu_custom_call.1} parent=5 // pred_check_branch
      %161 = sbr.rel (%p158) target = $region32
    $region31: #{tpu_custom_call.1} parent=5 // pred_region
      %s162 = ssub.s32 %s9, 1
      %p163 = scmp.lt.s32.totalorder %s14, 1
      %s164 = scalar_select %p163, %s14, 1
      %s165 = smul.addr %s164, 32
      %s166 = smul.addr %s165, 8
      %s167 = scalar_lea.vmem %s0, %s166
      %p168 = pneg %p35
      %p169 = pneg %p32
      %p170 = scmp.lt.s32.totalorder %s14, 1
      %s171 = scalar_select %p170, %s14, 1
      %s172 = smul.addr %s171, 32
      %s173 = smul.addr %s172, 8
      %s174 = scalar_lea.vmem %s1, %s173
      %p175 = pneg %p61
      %p176 = pneg %p58
      %p177 = scmp.lt.s32.totalorder %s14, 1
      %s178 = scalar_select %p177, %s14, 1
      %s179 = smul.addr %s178, 32
      %s180 = smul.addr %s179, 8
      %s181 = scalar_lea.vmem %s2, %s180
      %p182 = pneg %p87
      %p183 = pneg %p84
      %p184 = pneg %p113
      %p185 = pneg %p110
      %p186 = scmp.lt.s32.totalorder %s14, 1
      %s187 = scalar_select %p186, %s14, 1
      %s188 = smul.addr %s187, 32
      %s189 = smul.addr %s188, 8
      %s190 = scalar_lea.vmem %s3, %s189
      %p191 = scmp.lt.s32.totalorder %s14, 1
      %s192 = scalar_select %p191, %s14, 1
      %s193 = smul.addr %s192, 32
      %s194 = smul.addr %s193, 8
      %s195 = scalar_lea.vmem %s0, %s194
      %p196 = scmp.lt.s32.totalorder %s14, 1
      %s197 = scalar_select %p196, %s14, 1
      %s198 = smul.addr %s197, 32
      %s199 = smul.addr %s198, 8
      %s200 = scalar_lea.vmem %s1, %s199
      %p201 = scmp.lt.s32.totalorder %s14, 1
      %s202 = scalar_select %p201, %s14, 1
      %s203 = smul.addr %s202, 32
      %s204 = smul.addr %s203, 8
      %s205 = scalar_lea.vmem %s2, %s204
      %p206 = scmp.lt.s32.totalorder %s14, 1
      %s207 = scalar_select %p206, %s14, 1
      %s208 = smul.addr %s207, 32
      %s209 = smul.addr %s208, 8
      %s210 = scalar_lea.vmem %s3, %s209
      %v211 = vld [vmem:[%s195] sm:$0xff]
      %v212 = vld [vmem:[%s195 + $0x8] sm:$0xff]
      %v213 = vld [vmem:[%s195 + $0x10] sm:$0xff]
      %v214 = vld [vmem:[%s195 + $0x18] sm:$0xff]
      %v215 = vld [vmem:[%s195 + $0x20] sm:$0xff]
      %v216 = vld [vmem:[%s195 + $0x28] sm:$0xff]
      %v217 = vld [vmem:[%s195 + $0x30] sm:$0xff]
      %v218 = vld [vmem:[%s195 + $0x38] sm:$0xff]
      %v219 = vld [vmem:[%s195 + $0x40] sm:$0xff]
      %v220 = vld [vmem:[%s195 + $0x48] sm:$0xff]
      %v221 = vld [vmem:[%s195 + $0x50] sm:$0xff]
      %v222 = vld [vmem:[%s195 + $0x58] sm:$0xff]
      %v223 = vld [vmem:[%s195 + $0x60] sm:$0xff]
      %v224 = vld [vmem:[%s195 + $0x68] sm:$0xff]
      %v225 = vld [vmem:[%s195 + $0x70] sm:$0xff]
      %v226 = vld [vmem:[%s195 + $0x78] sm:$0xff]
      %v227 = vld [vmem:[%s195 + $0x80] sm:$0xff]
      %v228 = vld [vmem:[%s195 + $0x88] sm:$0xff]
      %v229 = vld [vmem:[%s195 + $0x90] sm:$0xff]
      %v230 = vld [vmem:[%s195 + $0x98] sm:$0xff]
      %v231 = vld [vmem:[%s195 + $0xa0] sm:$0xff]
      %v232 = vld [vmem:[%s195 + $0xa8] sm:$0xff]
      %v233 = vld [vmem:[%s195 + $0xb0] sm:$0xff]
      %v234 = vld [vmem:[%s195 + $0xb8] sm:$0xff]
      %v235 = vld [vmem:[%s195 + $0xc0] sm:$0xff]
      %v236 = vld [vmem:[%s195 + $0xc8] sm:$0xff]
      %v237 = vld [vmem:[%s195 + $0xd0] sm:$0xff]
      %v238 = vld [vmem:[%s195 + $0xd8] sm:$0xff]
      %v239 = vld [vmem:[%s195 + $0xe0] sm:$0xff]
      %v240 = vld [vmem:[%s195 + $0xe8] sm:$0xff]
      %v241 = vld [vmem:[%s195 + $0xf0] sm:$0xff]
      %v242 = vld [vmem:[%s195 + $0xf8] sm:$0xff]
      %v243 = vld [vmem:[%s200] sm:$0xff]
      %v244 = vld [vmem:[%s200 + $0x8] sm:$0xff]
      %v245 = vld [vmem:[%s200 + $0x10] sm:$0xff]
      %v246 = vld [vmem:[%s200 + $0x18] sm:$0xff]
      %v247 = vld [vmem:[%s200 + $0x20] sm:$0xff]
      %v248 = vld [vmem:[%s200 + $0x28] sm:$0xff]
      %v249 = vld [vmem:[%s200 + $0x30] sm:$0xff]
      %v250 = vld [vmem:[%s200 + $0x38] sm:$0xff]
      %v251 = vld [vmem:[%s200 + $0x40] sm:$0xff]
      %v252 = vld [vmem:[%s200 + $0x48] sm:$0xff]
      %v253 = vld [vmem:[%s200 + $0x50] sm:$0xff]
      %v254 = vld [vmem:[%s200 + $0x58] sm:$0xff]
      %v255 = vld [vmem:[%s200 + $0x60] sm:$0xff]
      %v256 = vld [vmem:[%s200 + $0x68] sm:$0xff]
      %v257 = vld [vmem:[%s200 + $0x70] sm:$0xff]
      %v258 = vld [vmem:[%s200 + $0x78] sm:$0xff]
      %v259 = vld [vmem:[%s200 + $0x80] sm:$0xff]
      %v260 = vld [vmem:[%s200 + $0x88] sm:$0xff]
      %v261 = vld [vmem:[%s200 + $0x90] sm:$0xff]
      %v262 = vld [vmem:[%s200 + $0x98] sm:$0xff]
      %v263 = vld [vmem:[%s200 + $0xa0] sm:$0xff]
      %v264 = vld [vmem:[%s200 + $0xa8] sm:$0xff]
      %v265 = vld [vmem:[%s200 + $0xb0] sm:$0xff]
      %v266 = vld [vmem:[%s200 + $0xb8] sm:$0xff]
      %v267 = vld [vmem:[%s200 + $0xc0] sm:$0xff]
      %v268 = vld [vmem:[%s200 + $0xc8] sm:$0xff]
      %v269 = vld [vmem:[%s200 + $0xd0] sm:$0xff]
      %v270 = vld [vmem:[%s200 + $0xd8] sm:$0xff]
      %v271 = vld [vmem:[%s200 + $0xe0] sm:$0xff]
      %v272 = vld [vmem:[%s200 + $0xe8] sm:$0xff]
      %v273 = vld [vmem:[%s200 + $0xf0] sm:$0xff]
      %v274 = vld [vmem:[%s200 + $0xf8] sm:$0xff]
      %v275 = vld [vmem:[%s205] sm:$0xff]
      %v276 = vld [vmem:[%s205 + $0x8] sm:$0xff]
      %v277 = vld [vmem:[%s205 + $0x10] sm:$0xff]
      %v278 = vld [vmem:[%s205 + $0x18] sm:$0xff]
      %v279 = vld [vmem:[%s205 + $0x20] sm:$0xff]
      %v280 = vld [vmem:[%s205 + $0x28] sm:$0xff]
      %v281 = vld [vmem:[%s205 + $0x30] sm:$0xff]
      %v282 = vld [vmem:[%s205 + $0x38] sm:$0xff]
      %v283 = vld [vmem:[%s205 + $0x40] sm:$0xff]
      %v284 = vld [vmem:[%s205 + $0x48] sm:$0xff]
      %v285 = vld [vmem:[%s205 + $0x50] sm:$0xff]
      %v286 = vld [vmem:[%s205 + $0x58] sm:$0xff]
      %v287 = vld [vmem:[%s205 + $0x60] sm:$0xff]
      %v288 = vld [vmem:[%s205 + $0x68] sm:$0xff]
      %v289 = vld [vmem:[%s205 + $0x70] sm:$0xff]
      %v290 = vld [vmem:[%s205 + $0x78] sm:$0xff]
      %v291 = vld [vmem:[%s205 + $0x80] sm:$0xff]
      %v292 = vld [vmem:[%s205 + $0x88] sm:$0xff]
      %v293 = vld [vmem:[%s205 + $0x90] sm:$0xff]
      %v294 = vld [vmem:[%s205 + $0x98] sm:$0xff]
      %v295 = vld [vmem:[%s205 + $0xa0] sm:$0xff]
      %v296 = vld [vmem:[%s205 + $0xa8] sm:$0xff]
      %v297 = vld [vmem:[%s205 + $0xb0] sm:$0xff]
      %v298 = vld [vmem:[%s205 + $0xb8] sm:$0xff]
      %v299 = vld [vmem:[%s205 + $0xc0] sm:$0xff]
      %v300 = vld [vmem:[%s205 + $0xc8] sm:$0xff]
      %v301 = vld [vmem:[%s205 + $0xd0] sm:$0xff]
      %v302 = vld [vmem:[%s205 + $0xd8] sm:$0xff]
      %v303 = vld [vmem:[%s205 + $0xe0] sm:$0xff]
      %v304 = vld [vmem:[%s205 + $0xe8] sm:$0xff]
      %v305 = vld [vmem:[%s205 + $0xf0] sm:$0xff]
      %v306 = vld [vmem:[%s205 + $0xf8] sm:$0xff]
      %307 = vxpose.xlu0.b32.start [1/16] %v211, 128
      %308 = vxpose.xlu0.b32.cont [2/16] %v212, 128
      %309 = vxpose.xlu0.b32.cont [3/16] %v213, 128
      %310 = vxpose.xlu0.b32.cont [4/16] %v214, 128
      %311 = vxpose.xlu0.b32.cont [5/16] %v215, 128
      %312 = vxpose.xlu0.b32.cont [6/16] %v216, 128
      %313 = vxpose.xlu0.b32.cont [7/16] %v217, 128
      %314 = vxpose.xlu0.b32.cont [8/16] %v218, 128
      %315 = vxpose.xlu0.b32.cont [9/16] %v219, 128
      %316 = vxpose.xlu0.b32.cont [10/16] %v220, 128
      %317 = vxpose.xlu0.b32.cont [11/16] %v221, 128
      %318 = vxpose.xlu0.b32.cont [12/16] %v222, 128
      %319 = vxpose.xlu0.b32.cont [13/16] %v223, 128
      %320 = vxpose.xlu0.b32.cont [14/16] %v224, 128
      %321 = vxpose.xlu0.b32.cont [15/16] %v225, 128
      %322 = vxpose.xlu0.b32.end [16/16] %v226, 128
      %v323 = vpop.trf.xlu0
      %v324 = vpop.trf.xlu0
      %v325 = vpop.trf.xlu0
      %v326 = vpop.trf.xlu0
      %v327 = vpop.trf.xlu0
      %v328 = vpop.trf.xlu0
      %v329 = vpop.trf.xlu0
      %v330 = vpop.trf.xlu0
      %v331 = vpop.trf.xlu0
      %v332 = vpop.trf.xlu0
      %v333 = vpop.trf.xlu0
      %v334 = vpop.trf.xlu0
      %v335 = vpop.trf.xlu0
      %v336 = vpop.trf.xlu0
      %v337 = vpop.trf.xlu0
      %v338 = vpop.trf.xlu0
      %339 = vxpose.xlu0.b32.start [1/16] %v227, 128
      %340 = vxpose.xlu0.b32.cont [2/16] %v228, 128
      %341 = vxpose.xlu0.b32.cont [3/16] %v229, 128
      %342 = vxpose.xlu0.b32.cont [4/16] %v230, 128
      %343 = vxpose.xlu0.b32.cont [5/16] %v231, 128
      %344 = vxpose.xlu0.b32.cont [6/16] %v232, 128
      %345 = vxpose.xlu0.b32.cont [7/16] %v233, 128
      %346 = vxpose.xlu0.b32.cont [8/16] %v234, 128
      %347 = vxpose.xlu0.b32.cont [9/16] %v235, 128
      %348 = vxpose.xlu0.b32.cont [10/16] %v236, 128
      %349 = vxpose.xlu0.b32.cont [11/16] %v237, 128
      %350 = vxpose.xlu0.b32.cont [12/16] %v238, 128
      %351 = vxpose.xlu0.b32.cont [13/16] %v239, 128
      %352 = vxpose.xlu0.b32.cont [14/16] %v240, 128
      %353 = vxpose.xlu0.b32.cont [15/16] %v241, 128
      %354 = vxpose.xlu0.b32.end [16/16] %v242, 128
      %v355 = vpop.trf.xlu0
      %v356 = vpop.trf.xlu0
      %v357 = vpop.trf.xlu0
      %v358 = vpop.trf.xlu0
      %v359 = vpop.trf.xlu0
      %v360 = vpop.trf.xlu0
      %v361 = vpop.trf.xlu0
      %v362 = vpop.trf.xlu0
      %v363 = vpop.trf.xlu0
      %v364 = vpop.trf.xlu0
      %v365 = vpop.trf.xlu0
      %v366 = vpop.trf.xlu0
      %v367 = vpop.trf.xlu0
      %v368 = vpop.trf.xlu0
      %v369 = vpop.trf.xlu0
      %v370 = vpop.trf.xlu0
      %371 = vmatprep.subr.mxu0 0.0
      %372 = vmatpush1.msra.mxu0 %v243
      %373 = vmatprep.subr.mxu0 0.0
      %374 = vmatpush1.msra.mxu0 %v244
      %375 = vmatprep.subr.mxu0 0.0
      %376 = vmatpush1.msra.mxu0 %v245
      %377 = vmatprep.subr.mxu0 0.0
      %378 = vmatpush1.msra.mxu0 %v246
      %379 = vmatprep.subr.mxu0 0.0
      %380 = vmatpush1.msra.mxu0 %v247
      %381 = vmatprep.subr.mxu0 0.0
      %382 = vmatpush1.msra.mxu0 %v248
      %383 = vmatprep.subr.mxu0 0.0
      %384 = vmatpush1.msra.mxu0 %v249
      %385 = vmatprep.subr.mxu0 0.0
      %386 = vmatpush1.msra.mxu0 %v250
      %387 = vmatprep.subr.mxu0 0.0
      %388 = vmatpush1.msra.mxu0 %v251
      %389 = vmatprep.subr.mxu0 0.0
      %390 = vmatpush1.msra.mxu0 %v252
      %391 = vmatprep.subr.mxu0 0.0
      %392 = vmatpush1.msra.mxu0 %v253
      %393 = vmatprep.subr.mxu0 0.0
      %394 = vmatpush1.msra.mxu0 %v254
      %395 = vmatprep.subr.mxu0 0.0
      %396 = vmatpush1.msra.mxu0 %v255
      %397 = vmatprep.subr.mxu0 0.0
      %398 = vmatpush1.msra.mxu0 %v256
      %399 = vmatprep.subr.mxu0 0.0
      %400 = vmatpush1.msra.mxu0 %v257
      %401 = vmatprep.subr.mxu0 0.0
      %402 = vmatpush1.msra.mxu0 %v258
      %403 = vmatprep.subr.mxu0 0.0
      %404 = vmatpush1.msra.mxu0 %v259
      %405 = vmatprep.subr.mxu0 0.0
      %406 = vmatpush1.msra.mxu0 %v260
      %407 = vmatprep.subr.mxu0 0.0
      %408 = vmatpush1.msra.mxu0 %v261
      %409 = vmatprep.subr.mxu0 0.0
      %410 = vmatpush1.msra.mxu0 %v262
      %411 = vmatprep.subr.mxu0 0.0
      %412 = vmatpush1.msra.mxu0 %v263
      %413 = vmatprep.subr.mxu0 0.0
      %414 = vmatpush1.msra.mxu0 %v264
      %415 = vmatprep.subr.mxu0 0.0
      %416 = vmatpush1.msra.mxu0 %v265
      %417 = vmatprep.subr.mxu0 0.0
      %418 = vmatpush1.msra.mxu0 %v266
      %419 = vmatprep.subr.mxu0 0.0
      %420 = vmatpush1.msra.mxu0 %v267
      %421 = vmatprep.subr.mxu0 0.0
      %422 = vmatpush1.msra.mxu0 %v268
      %423 = vmatprep.subr.mxu0 0.0
      %424 = vmatpush1.msra.mxu0 %v269
      %425 = vmatprep.subr.mxu0 0.0
      %426 = vmatpush1.msra.mxu0 %v270
      %427 = vmatprep.subr.mxu0 0.0
      %428 = vmatpush1.msra.mxu0 %v271
      %429 = vmatprep.subr.mxu0 0.0
      %430 = vmatpush1.msra.mxu0 %v272
      %431 = vmatprep.subr.mxu0 0.0
      %432 = vmatpush1.msra.mxu0 %v273
      %433 = vmatprep.subr.mxu0 0.0
      %434 = vmatpush1.msra.mxu0 %v274
      %435 = vmatprep.mubr.f32.mxu0 %v355
      %436 = vmatmul.mubr.f32.gmra.mrb[0].mxu0 %v323
      %v437 = vpop.f32.mrb[0].mxu0
      %v438 = vadd.f32 0.0, %v437
      %v439 = vpop.f32.mrb[0].mxu0
      %440 = vdwg.mxu0
      %vm441 = vcmask 64512
      %v442 = vsel %vm441, %v438, -inf
      %443 = vmax.xlane.f32.xlu0 %v442
      %v444 = vpop.xlane.xlu0 %443
      %v445 = vsub.f32 %v438, %v444
      %v446 = vmul.f32 %v445, 1.442695
      %v447 = vpow.pop %v446
      %v448 = vsel %vm441, %v447, 0.0
      %449 = vadd.xlane.f32.xlu0 %v448
      %v450 = vpop.xlane.xlu0 %449
      %v451 = vrcp.pop %v450
      %v452 = vmul.f32 %v447, %v451
      %v454 = vsel %vm441, %v275, 0
      %v457 = vsel %vm441, %v276, 0
      %v460 = vsel %vm441, %v277, 0
      %v463 = vsel %vm441, %v278, 0
      %v466 = vsel %vm441, %v279, 0
      %v469 = vsel %vm441, %v280, 0
      %v472 = vsel %vm441, %v281, 0
      %v475 = vsel %vm441, %v282, 0
      %v478 = vsel %vm441, %v283, 0
      %v481 = vsel %vm441, %v284, 0
      %v484 = vsel %vm441, %v285, 0
      %v487 = vsel %vm441, %v286, 0
      %v490 = vsel %vm441, %v287, 0
      %v493 = vsel %vm441, %v288, 0
      %v496 = vsel %vm441, %v289, 0
      %v499 = vsel %vm441, %v290, 0
      %v502 = vsel %vm441, %v291, 0
      %v505 = vsel %vm441, %v292, 0
      %v508 = vsel %vm441, %v293, 0
      %v511 = vsel %vm441, %v294, 0
      %v514 = vsel %vm441, %v295, 0
      %v517 = vsel %vm441, %v296, 0
      %v520 = vsel %vm441, %v297, 0
      %v523 = vsel %vm441, %v298, 0
      %v526 = vsel %vm441, %v299, 0
      %v529 = vsel %vm441, %v300, 0
      %v532 = vsel %vm441, %v301, 0
      %v535 = vsel %vm441, %v302, 0
      %v538 = vsel %vm441, %v303, 0
      %v541 = vsel %vm441, %v304, 0
      %v544 = vsel %vm441, %v305, 0
      %v547 = vsel %vm441, %v306, 0
      %v550 = vsel %vm441, %v452, 0
      %552 = vmatprep.subr.mxu0 0.0
      %553 = vmatpush1.xpose.msra.mxu0 %v550
      %554 = vmatprep.subr.mxu0 0.0
      %555 = vmatpush1.xpose.msra.mxu0 0.0
      %556 = vmatprep.subr.mxu0 0.0
      %557 = vmatpush1.xpose.msra.mxu0 0.0
      %558 = vmatprep.subr.mxu0 0.0
      %559 = vmatpush1.xpose.msra.mxu0 0.0
      %560 = vmatprep.subr.mxu0 0.0
      %561 = vmatpush1.xpose.msra.mxu0 0.0
      %562 = vmatprep.subr.mxu0 0.0
      %563 = vmatpush1.xpose.msra.mxu0 0.0
      %564 = vmatprep.subr.mxu0 0.0
      %565 = vmatpush1.xpose.msra.mxu0 0.0
      %566 = vmatprep.subr.mxu0 0.0
      %567 = vmatpush1.xpose.msra.mxu0 0.0
      %568 = vmatprep.subr.mxu0 0.0
      %569 = vmatpush1.xpose.msra.mxu0 0.0
      %570 = vmatprep.subr.mxu0 0.0
      %571 = vmatpush1.xpose.msra.mxu0 0.0
      %572 = vmatprep.subr.mxu0 0.0
      %573 = vmatpush1.xpose.msra.mxu0 0.0
      %574 = vmatprep.subr.mxu0 0.0
      %575 = vmatpush1.xpose.msra.mxu0 0.0
      %576 = vmatprep.subr.mxu0 0.0
      %577 = vmatpush1.xpose.msra.mxu0 0.0
      %578 = vmatprep.subr.mxu0 0.0
      %579 = vmatpush1.xpose.msra.mxu0 0.0
      %580 = vmatprep.subr.mxu0 0.0
      %581 = vmatpush1.xpose.msra.mxu0 0.0
      %582 = vmatprep.subr.mxu0 0.0
      %583 = vmatpush1.xpose.msra.mxu0 0.0
      %584 = vmatprep.subr.mxu0 0.0
      %585 = vmatpush1.xpose.msra.mxu0 0.0
      %586 = vmatprep.subr.mxu0 0.0
      %587 = vmatpush1.xpose.msra.mxu0 0.0
      %588 = vmatprep.subr.mxu0 0.0
      %589 = vmatpush1.xpose.msra.mxu0 0.0
      %590 = vmatprep.subr.mxu0 0.0
      %591 = vmatpush1.xpose.msra.mxu0 0.0
      %592 = vmatprep.subr.mxu0 0.0
      %593 = vmatpush1.xpose.msra.mxu0 0.0
      %594 = vmatprep.subr.mxu0 0.0
      %595 = vmatpush1.xpose.msra.mxu0 0.0
      %596 = vmatprep.subr.mxu0 0.0
      %597 = vmatpush1.xpose.msra.mxu0 0.0
      %598 = vmatprep.subr.mxu0 0.0
      %599 = vmatpush1.xpose.msra.mxu0 0.0
      %600 = vmatprep.subr.mxu0 0.0
      %601 = vmatpush1.xpose.msra.mxu0 0.0
      %602 = vmatprep.subr.mxu0 0.0
      %603 = vmatpush1.xpose.msra.mxu0 0.0
      %604 = vmatprep.subr.mxu0 0.0
      %605 = vmatpush1.xpose.msra.mxu0 0.0
      %606 = vmatprep.subr.mxu0 0.0
      %607 = vmatpush1.xpose.msra.mxu0 0.0
      %608 = vmatprep.subr.mxu0 0.0
      %609 = vmatpush1.xpose.msra.mxu0 0.0
      %610 = vmatprep.subr.mxu0 0.0
      %611 = vmatpush1.xpose.msra.mxu0 0.0
      %612 = vmatprep.subr.mxu0 0.0
      %613 = vmatpush1.xpose.msra.mxu0 0.0
      %614 = vmatprep.subr.mxu0 0.0
      %615 = vmatpush1.xpose.msra.mxu0 0.0
      %616 = vmatprep.mubr.f32.mxu0 0.0
      %617 = vmatmul.mubr.f32.gmra.mrb[0].mxu0 %v454
      %v618 = vpop.f32.mrb[0].mxu0
      %v619 = vadd.f32 0.0, %v618
      %v620 = vpop.f32.mrb[0].mxu0
      %621 = vmatprep.mubr.f32.mxu0 0.0
      %622 = vmatmul.mubr.f32.gmra.mrb[0].mxu0 %v457
      %v623 = vpop.f32.mrb[0].mxu0
      %v624 = vadd.f32 0.0, %v623
      %v625 = vpop.f32.mrb[0].mxu0
      %626 = vmatprep.mubr.f32.mxu0 0.0
      %627 = vmatmul.mubr.f32.gmra.mrb[0].mxu0 %v460
      %v628 = vpop.f32.mrb[0].mxu0
      %v629 = vadd.f32 0.0, %v628
      %v630 = vpop.f32.mrb[0].mxu0
      %631 = vmatprep.mubr.f32.mxu0 0.0
      %632 = vmatmul.mubr.f32.gmra.mrb[0].mxu0 %v463
      %v633 = vpop.f32.mrb[0].mxu0
      %v634 = vadd.f32 0.0, %v633
      %v635 = vpop.f32.mrb[0].mxu0
      %636 = vmatprep.mubr.f32.mxu0 0.0
      %637 = vmatmul.mubr.f32.gmra.mrb[0].mxu0 %v466
      %v638 = vpop.f32.mrb[0].mxu0
      %v639 = vadd.f32 0.0, %v638
      %v640 = vpop.f32.mrb[0].mxu0
      %641 = vmatprep.mubr.f32.mxu0 0.0
      %642 = vmatmul.mubr.f32.gmra.mrb[0].mxu0 %v469
      %v643 = vpop.f32.mrb[0].mxu0
      %v644 = vadd.f32 0.0, %v643
      %v645 = vpop.f32.mrb[0].mxu0
      %646 = vmatprep.mubr.f32.mxu0 0.0
      %647 = vmatmul.mubr.f32.gmra.mrb[0].mxu0 %v472
      %v648 = vpop.f32.mrb[0].mxu0
      %v649 = vadd.f32 0.0, %v648
      %v650 = vpop.f32.mrb[0].mxu0
      %651 = vmatprep.mubr.f32.mxu0 0.0
      %652 = vmatmul.mubr.f32.gmra.mrb[0].mxu0 %v475
      %v653 = vpop.f32.mrb[0].mxu0
      %v654 = vadd.f32 0.0, %v653
      %v655 = vpop.f32.mrb[0].mxu0
      %656 = vmatprep.mubr.f32.mxu0 0.0
      %657 = vmatmul.mubr.f32.gmra.mrb[0].mxu0 %v478
      %v658 = vpop.f32.mrb[0].mxu0
      %v659 = vadd.f32 0.0, %v658
      %v660 = vpop.f32.mrb[0].mxu0
      %661 = vmatprep.mubr.f32.mxu0 0.0
      %662 = vmatmul.mubr.f32.gmra.mrb[0].mxu0 %v481
      %v663 = vpop.f32.mrb[0].mxu0
      %v664 = vadd.f32 0.0, %v663
      %v665 = vpop.f32.mrb[0].mxu0
      %666 = vmatprep.mubr.f32.mxu0 0.0
      %667 = vmatmul.mubr.f32.gmra.mrb[0].mxu0 %v484
      %v668 = vpop.f32.mrb[0].mxu0
      %v669 = vadd.f32 0.0, %v668
      %v670 = vpop.f32.mrb[0].mxu0
      %671 = vmatprep.mubr.f32.mxu0 0.0
      %672 = vmatmul.mubr.f32.gmra.mrb[0].mxu0 %v487
      %v673 = vpop.f32.mrb[0].mxu0
      %v674 = vadd.f32 0.0, %v673
      %v675 = vpop.f32.mrb[0].mxu0
      %676 = vmatprep.mubr.f32.mxu0 0.0
      %677 = vmatmul.mubr.f32.gmra.mrb[0].mxu0 %v490
      %v678 = vpop.f32.mrb[0].mxu0
      %v679 = vadd.f32 0.0, %v678
      %v680 = vpop.f32.mrb[0].mxu0
      %681 = vmatprep.mubr.f32.mxu0 0.0
      %682 = vmatmul.mubr.f32.gmra.mrb[0].mxu0 %v493
      %v683 = vpop.f32.mrb[0].mxu0
      %v684 = vadd.f32 0.0, %v683
      %v685 = vpop.f32.mrb[0].mxu0
      %686 = vmatprep.mubr.f32.mxu0 0.0
      %687 = vmatmul.mubr.f32.gmra.mrb[0].mxu0 %v496
      %v688 = vpop.f32.mrb[0].mxu0
      %v689 = vadd.f32 0.0, %v688
      %v690 = vpop.f32.mrb[0].mxu0
      %691 = vmatprep.mubr.f32.mxu0 0.0
      %692 = vmatmul.mubr.f32.gmra.mrb[0].mxu0 %v499
      %v693 = vpop.f32.mrb[0].mxu0
      %v694 = vadd.f32 0.0, %v693
      %v695 = vpop.f32.mrb[0].mxu0
      %696 = vmatprep.mubr.f32.mxu0 0.0
      %697 = vmatmul.mubr.f32.gmra.mrb[0].mxu0 %v502
      %v698 = vpop.f32.mrb[0].mxu0
      %v699 = vadd.f32 0.0, %v698
      %v700 = vpop.f32.mrb[0].mxu0
      %701 = vmatprep.mubr.f32.mxu0 0.0
      %702 = vmatmul.mubr.f32.gmra.mrb[0].mxu0 %v505
      %v703 = vpop.f32.mrb[0].mxu0
      %v704 = vadd.f32 0.0, %v703
      %v705 = vpop.f32.mrb[0].mxu0
      %706 = vmatprep.mubr.f32.mxu0 0.0
      %707 = vmatmul.mubr.f32.gmra.mrb[0].mxu0 %v508
      %v708 = vpop.f32.mrb[0].mxu0
      %v709 = vadd.f32 0.0, %v708
      %v710 = vpop.f32.mrb[0].mxu0
      %711 = vmatprep.mubr.f32.mxu0 0.0
      %712 = vmatmul.mubr.f32.gmra.mrb[0].mxu0 %v511
      %v713 = vpop.f32.mrb[0].mxu0
      %v714 = vadd.f32 0.0, %v713
      %v715 = vpop.f32.mrb[0].mxu0
      %716 = vmatprep.mubr.f32.mxu0 0.0
      %717 = vmatmul.mubr.f32.gmra.mrb[0].mxu0 %v514
      %v718 = vpop.f32.mrb[0].mxu0
      %v719 = vadd.f32 0.0, %v718
      %v720 = vpop.f32.mrb[0].mxu0
      %721 = vmatprep.mubr.f32.mxu0 0.0
      %722 = vmatmul.mubr.f32.gmra.mrb[0].mxu0 %v517
      %v723 = vpop.f32.mrb[0].mxu0
      %v724 = vadd.f32 0.0, %v723
      %v725 = vpop.f32.mrb[0].mxu0
      %726 = vmatprep.mubr.f32.mxu0 0.0
      %727 = vmatmul.mubr.f32.gmra.mrb[0].mxu0 %v520
      %v728 = vpop.f32.mrb[0].mxu0
      %v729 = vadd.f32 0.0, %v728
      %v730 = vpop.f32.mrb[0].mxu0
      %731 = vmatprep.mubr.f32.mxu0 0.0
      %732 = vmatmul.mubr.f32.gmra.mrb[0].mxu0 %v523
      %v733 = vpop.f32.mrb[0].mxu0
      %v734 = vadd.f32 0.0, %v733
      %v735 = vpop.f32.mrb[0].mxu0
      %736 = vmatprep.mubr.f32.mxu0 0.0
      %737 = vmatmul.mubr.f32.gmra.mrb[0].mxu0 %v526
      %v738 = vpop.f32.mrb[0].mxu0
      %v739 = vadd.f32 0.0, %v738
      %v740 = vpop.f32.mrb[0].mxu0
      %741 = vmatprep.mubr.f32.mxu0 0.0
      %742 = vmatmul.mubr.f32.gmra.mrb[0].mxu0 %v529
      %v743 = vpop.f32.mrb[0].mxu0
      %v744 = vadd.f32 0.0, %v743
      %v745 = vpop.f32.mrb[0].mxu0
      %746 = vmatprep.mubr.f32.mxu0 0.0
      %747 = vmatmul.mubr.f32.gmra.mrb[0].mxu0 %v532
      %v748 = vpop.f32.mrb[0].mxu0
      %v749 = vadd.f32 0.0, %v748
      %v750 = vpop.f32.mrb[0].mxu0
      %751 = vmatprep.mubr.f32.mxu0 0.0
      %752 = vmatmul.mubr.f32.gmra.mrb[0].mxu0 %v535
      %v753 = vpop.f32.mrb[0].mxu0
      %v754 = vadd.f32 0.0, %v753
      %v755 = vpop.f32.mrb[0].mxu0
      %756 = vmatprep.mubr.f32.mxu0 0.0
      %757 = vmatmul.mubr.f32.gmra.mrb[0].mxu0 %v538
      %v758 = vpop.f32.mrb[0].mxu0
      %v759 = vadd.f32 0.0, %v758
      %v760 = vpop.f32.mrb[0].mxu0
      %761 = vmatprep.mubr.f32.mxu0 0.0
      %762 = vmatmul.mubr.f32.gmra.mrb[0].mxu0 %v541
      %v763 = vpop.f32.mrb[0].mxu0
      %v764 = vadd.f32 0.0, %v763
      %v765 = vpop.f32.mrb[0].mxu0
      %766 = vmatprep.mubr.f32.mxu0 0.0
      %767 = vmatmul.mubr.f32.gmra.mrb[0].mxu0 %v544
      %v768 = vpop.f32.mrb[0].mxu0
      %v769 = vadd.f32 0.0, %v768
      %v770 = vpop.f32.mrb[0].mxu0
      %771 = vmatprep.mubr.f32.mxu0 0.0
      %772 = vmatmul.mubr.f32.gmra.mrb[0].mxu0 %v547
      %v773 = vpop.f32.mrb[0].mxu0
      %v774 = vadd.f32 0.0, %v773
      %v775 = vpop.f32.mrb[0].mxu0
      %776 = vdwg.mxu0
      %777 = vst.msk [vmem:[%s210] sm:$0xff] %vm441, %v619
      %778 = vst.msk [vmem:[%s210 + $0x8] sm:$0xff] %vm441, %v624
      %779 = vst.msk [vmem:[%s210 + $0x10] sm:$0xff] %vm441, %v629
      %780 = vst.msk [vmem:[%s210 + $0x18] sm:$0xff] %vm441, %v634
      %781 = vst.msk [vmem:[%s210 + $0x20] sm:$0xff] %vm441, %v639
      %782 = vst.msk [vmem:[%s210 + $0x28] sm:$0xff] %vm441, %v644
      %783 = vst.msk [vmem:[%s210 + $0x30] sm:$0xff] %vm441, %v649
      %784 = vst.msk [vmem:[%s210 + $0x38] sm:$0xff] %vm441, %v654
      %785 = vst.msk [vmem:[%s210 + $0x40] sm:$0xff] %vm441, %v659
      %786 = vst.msk [vmem:[%s210 + $0x48] sm:$0xff] %vm441, %v664
      %787 = vst.msk [vmem:[%s210 + $0x50] sm:$0xff] %vm441, %v669
      %788 = vst.msk [vmem:[%s210 + $0x58] sm:$0xff] %vm441, %v674
      %789 = vst.msk [vmem:[%s210 + $0x60] sm:$0xff] %vm441, %v679
      %790 = vst.msk [vmem:[%s210 + $0x68] sm:$0xff] %vm441, %v684
      %791 = vst.msk [vmem:[%s210 + $0x70] sm:$0xff] %vm441, %v689
      %792 = vst.msk [vmem:[%s210 + $0x78] sm:$0xff] %vm441, %v694
      %793 = vst.msk [vmem:[%s210 + $0x80] sm:$0xff] %vm441, %v699
      %794 = vst.msk [vmem:[%s210 + $0x88] sm:$0xff] %vm441, %v704
      %795 = vst.msk [vmem:[%s210 + $0x90] sm:$0xff] %vm441, %v709
      %796 = vst.msk [vmem:[%s210 + $0x98] sm:$0xff] %vm441, %v714
      %797 = vst.msk [vmem:[%s210 + $0xa0] sm:$0xff] %vm441, %v719
      %798 = vst.msk [vmem:[%s210 + $0xa8] sm:$0xff] %vm441, %v724
      %799 = vst.msk [vmem:[%s210 + $0xb0] sm:$0xff] %vm441, %v729
      %800 = vst.msk [vmem:[%s210 + $0xb8] sm:$0xff] %vm441, %v734
      %801 = vst.msk [vmem:[%s210 + $0xc0] sm:$0xff] %vm441, %v739
      %802 = vst.msk [vmem:[%s210 + $0xc8] sm:$0xff] %vm441, %v744
      %803 = vst.msk [vmem:[%s210 + $0xd0] sm:$0xff] %vm441, %v749
      %804 = vst.msk [vmem:[%s210 + $0xd8] sm:$0xff] %vm441, %v754
      %805 = vst.msk [vmem:[%s210 + $0xe0] sm:$0xff] %vm441, %v759
      %806 = vst.msk [vmem:[%s210 + $0xe8] sm:$0xff] %vm441, %v764
      %807 = vst.msk [vmem:[%s210 + $0xf0] sm:$0xff] %vm441, %v769
      %808 = vst.msk [vmem:[%s210 + $0xf8] sm:$0xff] %vm441, %v774
      %p809 = scmp.lt.s32.totalorder %s14, 1
      %s810 = scalar_select %p809, %s14, 1
      %s811 = smul.addr %s810, 32
      %s812 = smul.addr %s811, 8
      %s813 = scalar_lea.vmem %s3, %s812
      // Predicated region
      $region33: #{tpu_custom_call.1} parent=31 // pred_check
        %p814 = pneg %p110
      $region34: #{tpu_custom_call.1} parent=31 // pred_check_branch
        %816 = sbr.rel (%p814) target = $region36
      $region35: #{tpu_custom_call.1} parent=31 // pred_region
        _
      $region36: #{tpu_custom_call.1} parent=31 // pred_fallthru
        _
    $region32: #{tpu_custom_call.1} parent=5 // pred_fallthru
      _
    %p817 = scmp.le.s32.totalorder 2, %s9
    // Predicated region
    $region37: #{tpu_custom_call.1} parent=5 // pred_check
      %p818 = pneg %p817
    $region38: #{tpu_custom_call.1} parent=5 // pred_check_branch
      %820 = sbr.rel (%p818) target = $region40
    $region39: #{tpu_custom_call.1} parent=5 // pred_region
      %s821 = ssub.s32 %s9, 2
      // Predicated region
      $region41: #{tpu_custom_call.1} parent=39 // pred_check
        %p822 = pneg %p116
      $region42: #{tpu_custom_call.1} parent=39 // pred_check_branch
        %824 = sbr.rel (%p822) target = $region44
      $region43: #{tpu_custom_call.1} parent=39 // pred_region
        %p825 = scmp.lt.s32.totalorder %s15, 1
        %s826 = scalar_select %p825, %s15, 1
        %s827 = smul.addr %s826, 32
        %s828 = smul.addr %s827, 8
        %s829 = scalar_lea.vmem %s3, %s828
      $region44: #{tpu_custom_call.1} parent=39 // pred_fallthru
        _
    $region40: #{tpu_custom_call.1} parent=5 // pred_fallthru
      _
  $region6: #{tpu_custom_call.1} parent=0 // loop_footer
    %s13 = sadd.s32 1, %s9
  $region7: #{tpu_custom_call.1} parent=0 // loop_footer_branch
    %8 = sbr.rel target = $region3
  $region8: #{tpu_custom_call.1} parent=0 // loop_exit
    _

</llo_original>
